<compile_context>
chip_gen: v5e
topology: v5e:2x2
jax: 0.10.0
libtpu: 0.0.40
codegen_flags: <defaults>
</compile_context>

<pallas_src>
import functools

import jax
import jax.numpy as jnp
from jax import lax
from jax.experimental import pallas as pl
from jax.experimental.pallas import tpu as pltpu  # noqa: F401  (not needed at these shapes)


# ----------------------------- hyperparameters ------------------------------
class HP:
    batch_size = 2
    n_mels = 16                      # hp.pretraining_insize (frequency bins)
    n_frames = 16                    # input time frames
    conv_sub_1_nodes = 8
    conv_sub_2_nodes = 4
    max_len = 8
    standard_linear_nodes = 32       # conformer model dim D
    mhsa_num_heads = 4
    conformer_ff1_linear1_nodes = 64
    n_conformers = 2
    conformer_depthwise_conv_kernel = 3
    projection_out_size = 16
    standard_decoder_nodes = 32
    standard_decoder_bidirectional = False
    standard_decoder_layers = 1
    ntokens = 10
    dropout = 0.1                    # identity at inference


NTOK_PAD = 128  # lane-dense classifier width (ntokens padded to a full 128-lane vreg)


# -------------------- small Pallas kernels (conv subsampling) ---------------
def _linear_kernel(x_ref, w_ref, b_ref, o_ref, *, act):
    y = jnp.dot(x_ref[...], w_ref[...], preferred_element_type=jnp.float32) + b_ref[...]
    if act == "relu":
        y = jnp.maximum(y, 0.0)
    o_ref[...] = y


def pallas_linear(x, w, b, act="none"):
    m = x.shape[0]
    n = w.shape[1]
    return pl.pallas_call(
        functools.partial(_linear_kernel, act=act),
        out_shape=jax.ShapeDtypeStruct((m, n), jnp.float32),
    )(x, w, b.reshape(1, n))


# ------------------------------- glue helpers -------------------------------
def im2col(x, kh, kw, stride):
    # x: NCHW. Returns patches (B*Ho*Wo, C*kh*kw) ordered (C, kh, kw) like torch conv flatten.
    b, c, h, w = x.shape
    ho = (h - kh) // stride + 1
    wo = (w - kw) // stride + 1
    cols = []
    for i in range(kh):
        for j in range(kw):
            cols.append(x[:, :, i:i + stride * ho:stride, j:j + stride * wo:stride])
    p = jnp.stack(cols, axis=2)                      # (B, C, kh*kw, Ho, Wo)
    p = p.transpose(0, 3, 4, 1, 2).reshape(b * ho * wo, c * kh * kw)
    return p, ho, wo


# ----------------------- fused encoder/decoder kernel ------------------------
_LAYER_PARAMS = (
    "ffn1_ln_g", "ffn1_ln_b", "ffn1_w1", "ffn1_b1", "ffn1_w2", "ffn1_b2",
    "mhsa_ln_g", "mhsa_ln_b", "wqkv", "bqkv", "wo", "bo",
    "conv_ln_g", "conv_ln_b", "pw1_w", "pw1_b", "dw_w", "dw_b",
    "bn_scale", "bn_shift", "pw2_w", "pw2_b",
    "ffn2_ln_g", "ffn2_ln_b", "ffn2_w1", "ffn2_b1", "ffn2_w2", "ffn2_b2",
    "final_ln_g", "final_ln_b",
)
_TAIL_PARAMS = (
    "proj_w", "proj_b", "proj_bn_scale", "proj_bn_shift",
    "lstm_wih", "lstm_whh", "lstm_b", "final_w", "final_b",
)


def _fused_kernel(*refs, hp, n_valid, t_max):
    names = ("xc",) + _LAYER_PARAMS + _TAIL_PARAMS
    r = dict(zip(names, refs[:len(names)]))
    o_ref = refs[len(names)]

    D = hp.standard_linear_nodes
    NH = hp.mhsa_num_heads
    dh = D // NH
    K = hp.conformer_depthwise_conv_kernel
    pad = (K - 1) // 2
    BT = n_valid * t_max
    B = hp.batch_size
    ML = hp.max_len
    HID = hp.standard_decoder_nodes
    scale = 1.0 / float(dh) ** 0.5

    def ln(x, g, b):
        mu = jnp.mean(x, axis=-1, keepdims=True)
        var = jnp.mean((x - mu) ** 2, axis=-1, keepdims=True)
        return (x - mu) * lax.rsqrt(var + 1e-5) * g + b

    def silu(x):
        return x * jax.nn.sigmoid(x)

    def mm(a, bmat):
        return jnp.dot(a, bmat, preferred_element_type=jnp.float32)

    # constants reused across layers
    row_b = lax.broadcasted_iota(jnp.int32, (BT, BT), 0) // t_max
    col_b = lax.broadcasted_iota(jnp.int32, (BT, BT), 1) // t_max
    same_batch = row_b == col_b                                   # block-diagonal batch mask
    ti = lax.broadcasted_iota(jnp.int32, (BT, D), 0) % t_max      # time index within a batch

    x2 = r["xc"][...]                                             # (BT, D)

    for l in range(hp.n_conformers):
        # ---- FFN1 (half-step residual) ----
        y = ln(x2, r["ffn1_ln_g"][l], r["ffn1_ln_b"][l])
        y = silu(mm(y, r["ffn1_w1"][l]) + r["ffn1_b1"][l])
        y = mm(y, r["ffn1_w2"][l]) + r["ffn1_b2"][l]
        x2 = x2 + 0.5 * y

        # ---- MHSA: fused QKV, all heads in one invocation ----
        # TODO(synk): key_padding_mask for ragged lengths not implemented (lengths are full).
        y = ln(x2, r["mhsa_ln_g"][l], r["mhsa_ln_b"][l])
        qkv = mm(y, r["wqkv"][l]) + r["bqkv"][l]                  # (BT, 3D)
        q = qkv[:, 0:D]
        k = qkv[:, D:2 * D]
        v = qkv[:, 2 * D:3 * D]
        heads = []
        for h in range(NH):
            qh = q[:, h * dh:(h + 1) * dh]
            kh = k[:, h * dh:(h + 1) * dh]
            vh = v[:, h * dh:(h + 1) * dh]
            s = lax.dot_general(qh, kh, (((1,), (1,)), ((), ())),
                                preferred_element_type=jnp.float32) * scale
            s = jnp.where(same_batch, s, -1e30)                   # block-diagonal over batches
            m = jnp.max(s, axis=-1, keepdims=True)
            p = jnp.exp(s - m)
            p = p / jnp.sum(p, axis=-1, keepdims=True)
            heads.append(mm(p, vh))
        attn = jnp.concatenate(heads, axis=-1)                    # (BT, D)
        x2 = x2 + mm(attn, r["wo"][l]) + r["bo"][l]

        # ---- Convolution module: LN -> pw(2D)+GLU -> depthwise -> BN -> SiLU -> pw ----
        y = ln(x2, r["conv_ln_g"][l], r["conv_ln_b"][l])
        y = mm(y, r["pw1_w"][l]) + r["pw1_b"][l]                  # (BT, 2D)
        y = y[:, 0:D] * jax.nn.sigmoid(y[:, D:2 * D])             # GLU
        dw = r["dw_w"][l]                                         # (K, D)
        acc = jnp.zeros((BT, D), jnp.float32) + r["dw_b"][l]
        for j in range(K):                                        # in-kernel "same" padding
            off = j - pad
            if off < 0:
                shifted = jnp.concatenate(
                    [jnp.zeros((-off, D), jnp.float32), y[:BT + off, :]], axis=0)
            elif off == 0:
                shifted = y
            else:
                shifted = jnp.concatenate(
                    [y[off:, :], jnp.zeros((off, D), jnp.float32)], axis=0)
            valid = jnp.logical_and(ti + off >= 0, ti + off < t_max)
            acc = acc + jnp.where(valid, shifted, 0.0) * dw[j:j + 1, :]
        y = acc * r["bn_scale"][l] + r["bn_shift"][l]             # BatchNorm1d (eval, folded)
        y = silu(y)
        y = mm(y, r["pw2_w"][l]) + r["pw2_b"][l]
        x2 = x2 + y

        # ---- FFN2 (half-step residual) + final LN ----
        y = ln(x2, r["ffn2_ln_g"][l], r["ffn2_ln_b"][l])
        y = silu(mm(y, r["ffn2_w1"][l]) + r["ffn2_b1"][l])
        y = mm(y, r["ffn2_w2"][l]) + r["ffn2_b2"][l]
        x2 = x2 + 0.5 * y
        x2 = ln(x2, r["final_ln_g"][l], r["final_ln_b"][l])

    # ---- pad back to (B*max_len, D) (identity when all lengths are full) ----
    if n_valid == B and t_max == ML:
        xp = x2
    else:
        blocks = []
        for b in range(B):
            if b < n_valid:
                blocks.append(x2[b * t_max:(b + 1) * t_max, :])
                if t_max < ML:
                    blocks.append(jnp.zeros((ML - t_max, D), jnp.float32))
            else:
                blocks.append(jnp.zeros((ML, D), jnp.float32))
        xp = jnp.concatenate(blocks, axis=0)

    # ---- projection block: Linear -> SiLU -> BatchNorm1d (eval, folded) ----
    y = silu(mm(xp, r["proj_w"][...]) + r["proj_b"][...])
    y = y * r["proj_bn_scale"][...] + r["proj_bn_shift"][...]     # (B*ML, PR)

    # ---- LSTM over the flattened B*max_len sequence (matches 2-D nn.LSTM input) ----
    # Input projection hoisted out of the recurrence; per-gate weights (no lane slicing
    # inside the serial loop); loop fully unrolled (short fixed trip count).
    T_total = B * ML
    gx = [mm(y, r["lstm_wih"][g]) + r["lstm_b"][g] for g in range(4)]   # 4 x (T, HID)
    whh = [r["lstm_whh"][g] for g in range(4)]                          # 4 x (HID, HID)
    h = jnp.zeros((1, HID), jnp.float32)
    c = jnp.zeros((1, HID), jnp.float32)
    hs = []
    for t in range(T_total):
        i_g = jax.nn.sigmoid(gx[0][t:t + 1, :] + mm(h, whh[0]))
        f_g = jax.nn.sigmoid(gx[1][t:t + 1, :] + mm(h, whh[1]))
        g_g = jnp.tanh(gx[2][t:t + 1, :] + mm(h, whh[2]))
        o_g = jax.nn.sigmoid(gx[3][t:t + 1, :] + mm(h, whh[3]))
        c = f_g * c + i_g * g_g
        h = o_g * jnp.tanh(c)
        hs.append(h)
    hseq = jnp.concatenate(hs, axis=0)                                  # (T, HID)

    # ---- final FC + log_softmax; lane-dense store (ntokens padded to 128) ----
    logits = mm(hseq, r["final_w"][...]) + r["final_b"][...]            # (T, NTOK_PAD)
    m = jnp.max(logits, axis=-1, keepdims=True)
    z = logits - m
    o_ref[...] = z - jnp.log(jnp.sum(jnp.exp(z), axis=-1, keepdims=True))


# ------------------------------ ASRNN forward -------------------------------
def asrnn_forward(params, x, input_lens, hp):
    B = hp.batch_size
    D = hp.standard_linear_nodes
    ML = hp.max_len

    # x.unsqueeze(1): (B, F, T) -> (B, 1, F, T)  [NCHW]
    x4 = x[:, None, :, :]

    # --- ConvSubSampling: Conv2d(1,C1,3,s=2)+ReLU, Conv2d(C1,C2,3,s=2)+ReLU ---
    # TODO(synk): ConvSubSampling source not provided; standard double stride-2 conv assumed.
    p1, h1, w1 = im2col(x4, 3, 3, 2)
    y1 = pallas_linear(p1, params["conv1_w"], params["conv1_b"], act="relu")
    y1 = y1.reshape(B, h1, w1, hp.conv_sub_1_nodes).transpose(0, 3, 1, 2)
    p2, h2, w2 = im2col(y1, 3, 3, 2)
    y2 = pallas_linear(p2, params["conv2_w"], params["conv2_b"], act="relu")
    y2 = y2.reshape(B, h2, w2, hp.conv_sub_2_nodes).transpose(0, 3, 1, 2)   # (B, C2, H2, W2)

    # flatten(1) -> standard_linear -> view (B, max_len, D); dropout = identity.
    xf = y2.reshape(B, -1)
    xl = pallas_linear(xf, params["std_w"], params["std_b"])                # (B, ML*D)
    x3 = xl.reshape(B, ML, D)

    # length handling (masked_select + slicing; static python, mirrors reference code)
    lens = [int(l) for l in input_lens if int(l) > 0]
    n_valid = len(lens)
    t_max = max(lens)
    xc = x3[:n_valid, :t_max, :].reshape(n_valid * t_max, D)
    output_lens = jnp.array(lens, dtype=jnp.int32)

    # --- one fused kernel: conformer stack -> projection -> LSTM -> FC -> log_softmax ---
    in_arrays = [xc]
    in_arrays += [params["conformer_stacked"][n] for n in _LAYER_PARAMS]
    in_arrays += [params[n] for n in _TAIL_PARAMS]

    out = pl.pallas_call(
        functools.partial(_fused_kernel, hp=hp, n_valid=n_valid, t_max=t_max),
        out_shape=jax.ShapeDtypeStruct((B * ML, NTOK_PAD), jnp.float32),
    )(*in_arrays)

    logp = out[:, :hp.ntokens].reshape(B, ML, hp.ntokens)
    # TODO(synk): lm branch (x + lm(ngram, argmax(x))) not implemented (lm=None call path).
    return logp, output_lens


# ------------------------------ parameter init ------------------------------
def init_params(key, hp):
    d = hp.standard_linear_nodes
    ff = hp.conformer_ff1_linear1_nodes
    k = hp.conformer_depthwise_conv_kernel
    pr = hp.projection_out_size
    hd = hp.standard_decoder_nodes
    c1, c2 = hp.conv_sub_1_nodes, hp.conv_sub_2_nodes

    h1 = (hp.n_mels - 3) // 2 + 1
    w1 = (hp.n_frames - 3) // 2 + 1
    h2 = (h1 - 3) // 2 + 1
    w2 = (w1 - 3) // 2 + 1
    out_size = c2 * h2 * w2

    keys = iter(jax.random.split(key, 512))

    def w(shape, scale=0.1):
        return (scale * jax.random.normal(next(keys), shape)).astype(jnp.float32)

    ones = lambda s: jnp.ones(s, jnp.float32)
    zeros = lambda s: jnp.zeros(s, jnp.float32)
    # BatchNorm1d eval with default running stats (mean=0, var=1) folds to a pure scale.
    bn_scale = lambda s: jnp.full(s, 1.0 / (1.0 + 1e-5) ** 0.5, jnp.float32)

    params = {
        "conv1_w": w((1 * 9, c1)), "conv1_b": w((c1,)),
        "conv2_w": w((c1 * 9, c2)), "conv2_b": w((c2,)),
        "std_w": w((out_size, d * hp.max_len)), "std_b": w((d * hp.max_len,)),
        "proj_w": w((d, pr)), "proj_b": w((pr,)),
        "proj_bn_scale": bn_scale((pr,)), "proj_bn_shift": zeros((pr,)),
        # LSTM gate order (i, f, g, o); b = b_ih + b_hh folded; weights stacked per gate.
        "lstm_wih": w((4, pr, hd)), "lstm_whh": w((4, hd, hd)), "lstm_b": w((4, hd)),
        "final_w": w((hd, hp.ntokens)), "final_b": w((hp.ntokens,)),
    }

    layers = []
    for _ in range(hp.n_conformers):
        layers.append({
            "ffn1_ln_g": ones((d,)), "ffn1_ln_b": zeros((d,)),
            "ffn1_w1": w((d, ff)), "ffn1_b1": w((ff,)),
            "ffn1_w2": w((ff, d)), "ffn1_b2": w((d,)),
            "mhsa_ln_g": ones((d,)), "mhsa_ln_b": zeros((d,)),
            "wqkv": w((d, 3 * d)), "bqkv": w((3 * d,)),   # fused in_proj (q|k|v)
            "wo": w((d, d)), "bo": w((d,)),
            "conv_ln_g": ones((d,)), "conv_ln_b": zeros((d,)),
            "pw1_w": w((d, 2 * d)), "pw1_b": w((2 * d,)),
            "dw_w": w((k, d)), "dw_b": w((d,)),
            "bn_scale": bn_scale((d,)), "bn_shift": zeros((d,)),
            "pw2_w": w((d, d)), "pw2_b": w((d,)),
            "ffn2_ln_g": ones((d,)), "ffn2_ln_b": zeros((d,)),
            "ffn2_w1": w((d, ff)), "ffn2_b1": w((ff,)),
            "ffn2_w2": w((ff, d)), "ffn2_b2": w((d,)),
            "final_ln_g": ones((d,)), "final_ln_b": zeros((d,)),
        })
    params["conformer_layers"] = layers
    return params


def prepare_params(params, hp):
    """One-time conversion to fused-kernel layout:
       * conformer per-layer params stacked on a leading layer axis; 1-D vectors -> (L,1,dim)
       * projection / LSTM biases reshaped to 2-D rows
       * final classifier padded to NTOK_PAD lanes (zero weights, -1e30 bias on pad columns)
    """
    p = dict(params)
    layers = p.pop("conformer_layers")
    stacked = {}
    for name in _LAYER_PARAMS:
        arrs = [ly[name] for ly in layers]
        arrs = [a.reshape(1, a.shape[0]) if a.ndim == 1 else a for a in arrs]
        stacked[name] = jnp.stack(arrs, axis=0)
    p["conformer_stacked"] = stacked

    pr = hp.projection_out_size
    hd = hp.standard_decoder_nodes
    p["proj_b"] = p["proj_b"].reshape(1, pr)
    p["proj_bn_scale"] = p["proj_bn_scale"].reshape(1, pr)
    p["proj_bn_shift"] = p["proj_bn_shift"].reshape(1, pr)
    p["lstm_b"] = p["lstm_b"].reshape(4, 1, hd)

    fw = jnp.zeros((hd, NTOK_PAD), jnp.float32).at[:, :hp.ntokens].set(p["final_w"])
    fb = jnp.full((1, NTOK_PAD), -1e30, jnp.float32).at[0, :hp.ntokens].set(p["final_b"])
    p["final_w"] = fw
    p["final_b"] = fb
    return p


# ----------------------------------- main ------------------------------------
if __name__ == "__main__":
    hp = HP()
    key = jax.random.PRNGKey(0)
    pkey, xkey = jax.random.split(key)
    params = prepare_params(init_params(pkey, hp), hp)

    # input mel spectrogram: (B, F, T)
    x = jax.random.normal(xkey, (hp.batch_size, hp.n_mels, hp.n_frames), dtype=jnp.float32)
    input_lens = [hp.max_len, hp.max_len]

    logp, out_lens = asrnn_forward(params, x, input_lens, hp)
    logp = jax.block_until_ready(logp)
    out_lens = jax.block_until_ready(out_lens)

    assert logp.shape == (hp.batch_size, hp.max_len, hp.ntokens)
    assert bool(jnp.all(jnp.isfinite(logp)))
    print("KERNEL_OK")
</pallas_src>

<mosaic_0001>
module attributes {stable_mosaic.version = 11 : i64} {
  func.func @_linear_kernel(%arg0: memref<98x9xf32, #tpu.memory_space<vmem>>, %arg1: memref<9x8xf32, #tpu.memory_space<vmem>>, %arg2: memref<1x8xf32, #tpu.memory_space<vmem>>, %arg3: memref<98x8xf32, #tpu.memory_space<vmem>>) attributes {dimension_semantics = [], scalar_prefetch = 0 : i64, scratch_operands = 0 : i64, tpu.core_type = #tpu.core_type<tc>} {
    %c0 = arith.constant 0 : index
    %c0_0 = arith.constant 0 : index
    %0 = vector.load %arg0[%c0, %c0_0] : memref<98x9xf32, #tpu.memory_space<vmem>>, vector<98x9xf32>
    %c0_1 = arith.constant 0 : index
    %c0_2 = arith.constant 0 : index
    %1 = vector.load %arg1[%c0_1, %c0_2] : memref<9x8xf32, #tpu.memory_space<vmem>>, vector<9x8xf32>
    %cst = arith.constant dense<0.000000e+00> : vector<98x8xf32>
    %2 = tpu.matmul %0, %1, %cst {dimension_numbers = #tpu.dot_dimension_numbers<[1], [0], [0], [1], [0, 0, 1, 1], [], []>} : vector<98x9xf32>, vector<9x8xf32>, vector<98x8xf32> -> vector<98x8xf32>
    %c0_3 = arith.constant 0 : index
    %c0_4 = arith.constant 0 : index
    %3 = vector.load %arg2[%c0_3, %c0_4] : memref<1x8xf32, #tpu.memory_space<vmem>>, vector<1x8xf32>
    %4 = vector.broadcast %3 : vector<1x8xf32> to vector<98x8xf32>
    %5 = arith.addf %2, %4 : vector<98x8xf32>
    %cst_5 = arith.constant 0.000000e+00 : f32
    %6 = vector.broadcast %cst_5 : f32 to vector<98x8xf32>
    %7 = arith.maximumf %5, %6 : vector<98x8xf32>
    %c0_6 = arith.constant 0 : index
    %c0_7 = arith.constant 0 : index
    %8 = vector.load %arg3[%c0_6, %c0_7] : memref<98x8xf32, #tpu.memory_space<vmem>>, vector<98x8xf32>
    tpu.vector_store %arg3[%c0_6, %c0_7], %7 {strides = array<i32>} : memref<98x8xf32, #tpu.memory_space<vmem>>, vector<98x8xf32>,
    return
  }
}

</mosaic_0001>

<llo_original>
// kernel: tpu_custom_call.1
$region0: #{tpu_custom_call.1}
  #allocation0 [shape = 'u32[]', space=smem, size = 0x4, offset = 0x4, fixed_abs, tag = 'smem constant byte address 0x4 - core index']
  #allocation1 [shape = 'u32[72,128]{1,0:T(1,128)}', space=vmem, size = 0x9000, scoped, tag = 'internal scratch']
  %s0 = inlined_call_operand.vmem [shape: f32[98,9], index: 0, kind: input, shape index: {}]
  %s1 = inlined_call_operand.vmem [shape: f32[9,8], index: 1, kind: input, shape index: {}]
  %s2 = inlined_call_operand.vmem [shape: f32[1,8], index: 2, kind: input, shape index: {}]
  %s3 = inlined_call_operand.vmem [shape: f32[98,8], index: 3, kind: output, shape index: {}]
  %s4 = sld [smem:[#allocation0]]
  $region22: #{tpu_custom_call.1} parent=0
    _
  %s6 = ssub.s32 1, %s4
  %s7 = scalar_select 0, %s6, %s4
  // Predicated region
  $region2: #{tpu_custom_call.1} parent=0 // pred_check
    _
  $region3: #{tpu_custom_call.1} parent=0 // pred_check_branch
    %9 = sbr.rel (0) target = $region5
  $region4: #{tpu_custom_call.1} parent=0 // pred_region
    _
  $region5: #{tpu_custom_call.1} parent=0 // pred_fallthru
    _
  // Predicated region
  $region6: #{tpu_custom_call.1} parent=0 // pred_check
    _
  $region7: #{tpu_custom_call.1} parent=0 // pred_check_branch
    %11 = sbr.rel (0) target = $region9
  $region8: #{tpu_custom_call.1} parent=0 // pred_region
    _
  $region9: #{tpu_custom_call.1} parent=0 // pred_fallthru
    _
  // Predicated region
  $region10: #{tpu_custom_call.1} parent=0 // pred_check
    _
  $region11: #{tpu_custom_call.1} parent=0 // pred_check_branch
    %13 = sbr.rel (0) target = $region13
  $region12: #{tpu_custom_call.1} parent=0 // pred_region
    _
  $region13: #{tpu_custom_call.1} parent=0 // pred_fallthru
    _
  %v14 = vld [vmem:[%s0] sm:$0xff]
  %v15 = vld [vmem:[%s0 + $0x8] sm:$0xff]
  %v16 = vld [vmem:[%s0 + $0x10] sm:$0xff]
  %v17 = vld [vmem:[%s0 + $0x18] sm:$0xff]
  %v18 = vld [vmem:[%s0 + $0x20] sm:$0xff]
  %v19 = vld [vmem:[%s0 + $0x28] sm:$0xff]
  %v20 = vld [vmem:[%s0 + $0x30] sm:$0xff]
  %v21 = vld [vmem:[%s0 + $0x38] sm:$0xff]
  %v22 = vld [vmem:[%s0 + $0x40] sm:$0xff]
  %v23 = vld [vmem:[%s0 + $0x48] sm:$0xff]
  %v24 = vld [vmem:[%s0 + $0x50] sm:$0xff]
  %v25 = vld [vmem:[%s0 + $0x58] sm:$0xff]
  %v26 = vld [vmem:[%s0 + $0x60] sm:$0x3]
  %v27 = vld [vmem:[%s1] sm:$0xff]
  %v28 = vld [vmem:[%s1 + $0x8] sm:$0x1]
  %v29 = vld [vmem:[%s2] sm:$0x1]
  %v31 = vperm.slane %v29, 0
  %vm33 = vcmask 72704
  %v35 = vsel %vm33, %v14, 0
  %v38 = vsel %vm33, %v15, 0
  %v41 = vsel %vm33, %v16, 0
  %v44 = vsel %vm33, %v17, 0
  %v47 = vsel %vm33, %v18, 0
  %v50 = vsel %vm33, %v19, 0
  %v53 = vsel %vm33, %v20, 0
  %v56 = vsel %vm33, %v21, 0
  %v59 = vsel %vm33, %v22, 0
  %v62 = vsel %vm33, %v23, 0
  %v65 = vsel %vm33, %v24, 0
  %v68 = vsel %vm33, %v25, 0
  %v71 = vsel %vm33, %v26, 0
  %vm73 = vcmask 1040384
  %v75 = vsel %vm73, %v28, 0
  %77 = vmatpush.msra.mxu0 0.0
  %78 = vmatpush.msra.mxu0 0.0
  %79 = vmatpush.msra.mxu0 0.0
  %80 = vmatpush.msra.mxu0 0.0
  %81 = vmatpush.msra.mxu0 0.0
  %82 = vmatpush.msra.mxu0 0.0
  %83 = vmatpush.msra.mxu0 0.0
  %84 = vmatpush.msra.mxu0 0.0
  %85 = vmatpush.msra.mxu0 0.0
  %86 = vmatpush.msra.mxu0 0.0
  %87 = vmatpush.msra.mxu0 0.0
  %88 = vmatpush.msra.mxu0 0.0
  %89 = vmatpush.msra.mxu0 0.0
  %90 = vmatpush.msra.mxu0 0.0
  %91 = vmatpush.msra.mxu0 %v75
  %92 = vmatpush.msra.mxu0 %v27
  %93 = vmatmul.f32.gmra.mxu0 %v35
  %v94 = vpop.f32.mrf.mxu0
  %v95 = vadd.f32 %v31, %v94
  %96 = vmatmul.f32.gmra.mxu0 %v38
  %v97 = vpop.f32.mrf.mxu0
  %v98 = vadd.f32 %v31, %v97
  %99 = vmatmul.f32.gmra.mxu0 %v41
  %v100 = vpop.f32.mrf.mxu0
  %v101 = vadd.f32 %v31, %v100
  %102 = vmatmul.f32.gmra.mxu0 %v44
  %v103 = vpop.f32.mrf.mxu0
  %v104 = vadd.f32 %v31, %v103
  %105 = vmatmul.f32.gmra.mxu0 %v47
  %v106 = vpop.f32.mrf.mxu0
  %v107 = vadd.f32 %v31, %v106
  %108 = vmatmul.f32.gmra.mxu0 %v50
  %v109 = vpop.f32.mrf.mxu0
  %v110 = vadd.f32 %v31, %v109
  %111 = vmatmul.f32.gmra.mxu0 %v53
  %v112 = vpop.f32.mrf.mxu0
  %v113 = vadd.f32 %v31, %v112
  %114 = vmatmul.f32.gmra.mxu0 %v56
  %v115 = vpop.f32.mrf.mxu0
  %v116 = vadd.f32 %v31, %v115
  %117 = vmatmul.f32.gmra.mxu0 %v59
  %v118 = vpop.f32.mrf.mxu0
  %v119 = vadd.f32 %v31, %v118
  %120 = vmatmul.f32.gmra.mxu0 %v62
  %v121 = vpop.f32.mrf.mxu0
  %v122 = vadd.f32 %v31, %v121
  %123 = vmatmul.f32.gmra.mxu0 %v65
  %v124 = vpop.f32.mrf.mxu0
  %v125 = vadd.f32 %v31, %v124
  %126 = vmatmul.f32.gmra.mxu0 %v68
  %v127 = vpop.f32.mrf.mxu0
  %v128 = vadd.f32 %v31, %v127
  %129 = vmatmul.f32.gmra.mxu0 %v71
  %v130 = vpop.f32.mrf.mxu0
  %v131 = vadd.f32 %v31, %v130
  %132 = vdwg.mxu0
  %v133 = vmax.f32 %v95, 0.0
  %v134 = vmax.f32 %v98, 0.0
  %v135 = vmax.f32 %v101, 0.0
  %v136 = vmax.f32 %v104, 0.0
  %v137 = vmax.f32 %v107, 0.0
  %v138 = vmax.f32 %v110, 0.0
  %v139 = vmax.f32 %v113, 0.0
  %v140 = vmax.f32 %v116, 0.0
  %v141 = vmax.f32 %v119, 0.0
  %v142 = vmax.f32 %v122, 0.0
  %v143 = vmax.f32 %v125, 0.0
  %v144 = vmax.f32 %v128, 0.0
  %v145 = vmax.f32 %v131, 0.0
  %vm146 = vcmask 64512
  %147 = vst.msk [vmem:[%s3] sm:$0xff] %vm146, %v133
  %148 = vst.msk [vmem:[%s3 + $0x8] sm:$0xff] %vm146, %v134
  %149 = vst.msk [vmem:[%s3 + $0x10] sm:$0xff] %vm146, %v135
  %150 = vst.msk [vmem:[%s3 + $0x18] sm:$0xff] %vm146, %v136
  %151 = vst.msk [vmem:[%s3 + $0x20] sm:$0xff] %vm146, %v137
  %152 = vst.msk [vmem:[%s3 + $0x28] sm:$0xff] %vm146, %v138
  %153 = vst.msk [vmem:[%s3 + $0x30] sm:$0xff] %vm146, %v139
  %154 = vst.msk [vmem:[%s3 + $0x38] sm:$0xff] %vm146, %v140
  %155 = vst.msk [vmem:[%s3 + $0x40] sm:$0xff] %vm146, %v141
  %156 = vst.msk [vmem:[%s3 + $0x48] sm:$0xff] %vm146, %v142
  %157 = vst.msk [vmem:[%s3 + $0x50] sm:$0xff] %vm146, %v143
  %158 = vst.msk [vmem:[%s3 + $0x58] sm:$0xff] %vm146, %v144
  %vm159 = vcmask 58368
  %160 = vst.msk [vmem:[%s3 + $0x60] sm:$0x3] %vm159, %v145
  // Predicated region
  $region14: #{tpu_custom_call.1} parent=0 // pred_check
    _
  $region15: #{tpu_custom_call.1} parent=0 // pred_check_branch
    %162 = sbr.rel (0) target = $region17
  $region16: #{tpu_custom_call.1} parent=0 // pred_region
    _
  $region17: #{tpu_custom_call.1} parent=0 // pred_fallthru
    _
  // Predicated region
  $region18: #{tpu_custom_call.1} parent=0 // pred_check
    _
  $region19: #{tpu_custom_call.1} parent=0 // pred_check_branch
    %164 = sbr.rel (0) target = $region21
  $region20: #{tpu_custom_call.1} parent=0 // pred_region
    _
  $region21: #{tpu_custom_call.1} parent=0 // pred_fallthru
    _

</llo_original>
